<compile_context>
chip_gen: v7x
topology: tpu7x:2x2x1
jax: 0.10.0
libtpu: 0.0.40
codegen_flags: <defaults>
</compile_context>

<pallas_src>
import functools

import jax
import jax.numpy as jnp
from jax import lax
from jax.experimental import pallas as pl
from jax.experimental.pallas import tpu as pltpu

# Dimension-semantics constants (string fallbacks keep older jaxlibs working).
_CORE_PARALLEL = getattr(pltpu, "CORE_PARALLEL", "parallel")
_PARALLEL = getattr(pltpu, "PARALLEL", "parallel")
_ARBITRARY = getattr(pltpu, "ARBITRARY", "arbitrary")


def _tpu_topology():
    """Best-effort (vmem_capacity_bytes, tensorcores_per_chip) query."""
    vmem_cap = None
    try:
        vmem_cap = int(pltpu.get_tpu_info().vmem_capacity_bytes)
    except Exception:
        vmem_cap = None

    kind = ""
    try:
        kind = jax.devices()[0].device_kind.lower()
    except Exception:
        pass

    if vmem_cap is None:
        # v7x has 64 MiB / TC; v5e/v6e have 128 MiB.
        vmem_cap = (64 << 20) if "7" in kind else (128 << 20)

    num_cores = 2 if "7" in kind else 1  # v7x: 2 TensorCores per chip
    try:
        info = pltpu.get_tpu_info()
        for attr in ("num_cores", "tensorcores_per_chip", "cores_per_chip",
                     "num_tensorcores"):
            v = getattr(info, attr, None)
            if isinstance(v, int) and v > 0:
                num_cores = v
                break
    except Exception:
        pass
    return vmem_cap, num_cores


def _ortho_kernel(x1_ref, x2_ref, o_ref, *, batch, block_rows, steps,
                  needs_mask, multi_slice):
    if multi_slice:
        p = pl.program_id(0)   # slice (TensorCore) index
        s = pl.program_id(1)   # sequential batch-tile step within the slice
    else:
        p = 0
        s = pl.program_id(0)

    # Output block for slice `p` is revisited across the sequential axis: it is
    # a resident accumulator (init at s==0; wrapper finalizes the mean).
    @pl.when(s == 0)
    def _init():
        o_ref[...] = jnp.zeros_like(o_ref)

    # Cast per-tile in VMEM (inputs stay in their original dtype in HBM).
    x1 = x1_ref[...].astype(jnp.float32)
    x2 = x2_ref[...].astype(jnp.float32)

    # Fold normalization into three per-row reductions + rsqrt; never
    # materialize x1/||x1|| or x2/||x2||.
    s11 = jnp.sum(x1 * x1, axis=1, keepdims=True)   # (TB, 1)
    s22 = jnp.sum(x2 * x2, axis=1, keepdims=True)   # (TB, 1)
    s12 = jnp.sum(x1 * x2, axis=1, keepdims=True)   # (TB, 1)

    # rsqrt(s11)*rsqrt(s22) (not rsqrt(s11*s22)) to avoid overflow of the
    # product.  Zero-norm rows -> NaN, matching torch.
    row_cos = s12 * lax.rsqrt(s11) * lax.rsqrt(s22)  # (TB, 1)

    if needs_mask:
        block_idx = p * steps + s
        is_full = (block_idx + 1) * block_rows <= batch  # scalar bool

        # Fast path: full in-bounds tile, no mask arithmetic at runtime.
        @pl.when(is_full)
        def _acc_full():
            o_ref[...] = o_ref[...] + jnp.sum(row_cos, axis=0, keepdims=True)

        # Slow path: ragged last tile and/or fully padded grid step.  The
        # select (not a multiply) guarantees garbage/NaN padding rows never
        # reach the sum.
        @pl.when(jnp.logical_not(is_full))
        def _acc_ragged():
            row_ids = block_idx * block_rows + lax.broadcasted_iota(
                jnp.int32, (block_rows, 1), 0)
            masked = jnp.where(row_ids < batch, row_cos, 0.0)
            o_ref[...] = o_ref[...] + jnp.sum(masked, axis=0, keepdims=True)
    else:
        o_ref[...] = o_ref[...] + jnp.sum(row_cos, axis=0, keepdims=True)


def ortho_loss(x1, x2, *, block_rows=None):
    """Pallas implementation of Ortho.forward(x1, x2) -> scalar loss."""
    assert x1.shape == x2.shape and x1.ndim == 2
    B, D = x1.shape
    itemsize = jnp.dtype(x1.dtype).itemsize

    vmem_cap, num_cores = _tpu_topology()

    # dtype-aware sublane rounding: 8 for f32, 16 for bf16, 32 for 8-bit.
    sub = max(8, 32 // itemsize)

    if block_rows is None:
        # ~vmem/16 per input block => 2 inputs x 2 pipeline buffers ~ vmem/4
        # (8 MiB/block on 128 MiB chips, 4 MiB/block on v7x's 64 MiB VMEM).
        budget_bytes = max(vmem_cap // 16, 1 << 20)
        tb = (budget_bytes // max(1, D * itemsize)) // sub * sub
        tb = max(sub, tb)
        block_rows = B if B <= tb else tb
    # block_rows is either == B (always a legal full-dim block) or a multiple
    # of the dtype's packed sublane count.

    total_blocks = -(-B // block_rows)

    # Unconditional 2-slice split on multi-core chips; single 1-D grid on
    # single-core chips (no wasted grid axis / extra output block).
    num_slices = 2 if (num_cores >= 2 and total_blocks >= 2) else 1
    steps = -(-total_blocks // num_slices)
    padded_grid = num_slices * steps > total_blocks
    needs_mask = (B % block_rows != 0) or padded_grid

    kernel = functools.partial(
        _ortho_kernel,
        batch=B,
        block_rows=block_rows,
        steps=steps,
        needs_mask=needs_mask,
        multi_slice=(num_slices > 1),
    )

    if num_slices == 1:
        grid = (steps,)
        in_index = lambda s: (s, 0)
        out_index = lambda s: (0, 0)
        sems_preferred = (_ARBITRARY,)
        sems_fallback = None
    else:
        grid = (num_slices, steps)
        if padded_grid:
            # Padded steps re-read the last real block (always in bounds);
            # their contribution is masked to zero inside the kernel.
            in_index = lambda p, s: (jnp.minimum(p * steps + s,
                                                 total_blocks - 1), 0)
        else:
            in_index = lambda p, s: (p * steps + s, 0)
        out_index = lambda p, s: (p, 0)
        sems_preferred = (_CORE_PARALLEL, _ARBITRARY)
        sems_fallback = (_PARALLEL, _ARBITRARY)

    # VMEM budget: 2 inputs x 2 pipeline buffers x block + headroom, clipped
    # to 3/4 of physical VMEM, floored at 32 MiB.
    block_bytes = block_rows * D * itemsize
    vmem_limit = max(32 << 20,
                     min(4 * block_bytes + (8 << 20), vmem_cap * 3 // 4))

    cost = pl.CostEstimate(
        flops=6 * B * D,                 # 3 fused multiply-add row reductions
        transcendentals=2 * B,           # two rsqrt per row
        bytes_accessed=2 * B * D * itemsize + num_slices * 8 * 128 * 4,
    )

    def _call(dim_sems):
        return pl.pallas_call(
            kernel,
            out_shape=jax.ShapeDtypeStruct((num_slices * 8, 128), jnp.float32),
            grid_spec=pltpu.PrefetchScalarGridSpec(
                num_scalar_prefetch=0,
                grid=grid,
                in_specs=[
                    pl.BlockSpec((block_rows, D), in_index),
                    pl.BlockSpec((block_rows, D), in_index),
                ],
                # One lane-dense (8, 128) accumulator block per slice
                # (full unmasked vector stores; no (1,1) masked vst path).
                out_specs=pl.BlockSpec((8, 128), out_index),
            ),
            compiler_params=pltpu.CompilerParams(
                dimension_semantics=dim_sems,
                vmem_limit_bytes=int(vmem_limit),
            ),
            cost_estimate=cost,
        )(x1, x2)

    try:
        out = _call(sems_preferred)
    except Exception:
        if sems_fallback is None:
            raise
        out = _call(sems_fallback)

    # Element [p*8, 0] holds slice p's partial sum of row cosines.
    partials = out[0::8, 0]
    return jnp.sum(partials) / jnp.float32(B)


def ortho_loss_ref(x1, x2):
    # Pure-JAX reference for sanity checking.
    x1n = x1 / jnp.linalg.norm(x1, axis=1, keepdims=True)
    x2n = x2 / jnp.linalg.norm(x2, axis=1, keepdims=True)
    return jnp.mean(jnp.einsum("ij,ij->i", x1n, x2n))


if __name__ == "__main__":
    key = jax.random.PRNGKey(0)
    k1, k2, k3, k4, k5, k6 = jax.random.split(key, 6)

    # MISA-sized instance vectors: batch=2, hidden=32 (single-tile path).
    x1 = jax.random.normal(k1, (2, 32), dtype=jnp.float32)
    x2 = jax.random.normal(k2, (2, 32), dtype=jnp.float32)
    loss = jax.block_until_ready(ortho_loss(x1, x2))
    ref = jax.block_until_ready(ortho_loss_ref(x1, x2))
    assert jnp.allclose(loss, ref, atol=1e-5, rtol=1e-5), (loss, ref)

    # Larger case: tiled, ragged tail, and (on multi-core chips) 2-slice path.
    x1b = jax.random.normal(k3, (1000, 256), dtype=jnp.float32)
    x2b = jax.random.normal(k4, (1000, 256), dtype=jnp.float32)
    loss_b = jax.block_until_ready(ortho_loss(x1b, x2b, block_rows=128))
    ref_b = jax.block_until_ready(ortho_loss_ref(x1b, x2b))
    assert jnp.allclose(loss_b, ref_b, atol=1e-5, rtol=1e-4), (loss_b, ref_b)

    # bf16 inputs (dtype-aware packed tiles; f32 accumulation in-kernel).
    x1c = jax.random.normal(k5, (100, 128), dtype=jnp.float32).astype(jnp.bfloat16)
    x2c = jax.random.normal(k6, (100, 128), dtype=jnp.float32).astype(jnp.bfloat16)
    loss_c = jax.block_until_ready(ortho_loss(x1c, x2c, block_rows=32))
    ref_c = jax.block_until_ready(
        ortho_loss_ref(x1c.astype(jnp.float32), x2c.astype(jnp.float32)))
    assert jnp.allclose(loss_c, ref_c, atol=1e-4, rtol=1e-4), (loss_c, ref_c)

    print("KERNEL_OK")
</pallas_src>

<mosaic_0001>
module attributes {stable_mosaic.version = 11 : i64} {
  func.func @_ortho_kernel(%arg0: i32, %arg1: memref<2x32xf32, #tpu.memory_space<vmem>>, %arg2: memref<2x32xf32, #tpu.memory_space<vmem>>, %arg3: memref<8x128xf32, #tpu.memory_space<vmem>>) attributes {dimension_semantics = [#tpu.dimension_semantics<arbitrary>], iteration_bounds = array<i64: 1>, scalar_prefetch = 0 : i64, scratch_operands = 0 : i64, tpu.core_type = #tpu.core_type<tc>, window_params = [{transform_indices = @transform_0, window_bounds = array<i64: 2, 32>}, {transform_indices = @transform_1, window_bounds = array<i64: 2, 32>}, {pipeline_mode = #tpu.pipeline_mode<synchronous>, transform_indices = @transform_2, window_bounds = array<i64: 8, 128>}]} {
    %c0_i32 = arith.constant 0 : i32
    %0 = arith.cmpi eq, %arg0, %c0_i32 : i32
    %1 = arith.extui %0 : i1 to i32
    %c0_i32_0 = arith.constant 0 : i32
    %2 = arith.cmpi ne, %1, %c0_i32_0 : i32
    scf.if %2 {
      %cst_11 = arith.constant 0.000000e+00 : f32
      %24 = vector.broadcast %cst_11 : f32 to vector<8x128xf32>
      %c0_12 = arith.constant 0 : index
      %c0_13 = arith.constant 0 : index
      %25 = vector.load %arg3[%c0_12, %c0_13] : memref<8x128xf32, #tpu.memory_space<vmem>>, vector<8x128xf32>
      tpu.vector_store %arg3[%c0_12, %c0_13], %24 {strides = array<i32>} : memref<8x128xf32, #tpu.memory_space<vmem>>, vector<8x128xf32>,
    } else {
    }
    %c0 = arith.constant 0 : index
    %c0_1 = arith.constant 0 : index
    %3 = vector.load %arg1[%c0, %c0_1] : memref<2x32xf32, #tpu.memory_space<vmem>>, vector<2x32xf32>
    %c0_2 = arith.constant 0 : index
    %c0_3 = arith.constant 0 : index
    %4 = vector.load %arg2[%c0_2, %c0_3] : memref<2x32xf32, #tpu.memory_space<vmem>>, vector<2x32xf32>
    %5 = arith.mulf %3, %3 : vector<2x32xf32>
    %cst = arith.constant dense<0.000000e+00> : vector<2xf32>
    %6 = vector.multi_reduction <add>, %5, %cst [1] : vector<2x32xf32> to vector<2xf32>
    %7 = vector.shape_cast %6 : vector<2xf32> to vector<2x1xf32>
    %8 = arith.mulf %4, %4 : vector<2x32xf32>
    %cst_4 = arith.constant dense<0.000000e+00> : vector<2xf32>
    %9 = vector.multi_reduction <add>, %8, %cst_4 [1] : vector<2x32xf32> to vector<2xf32>
    %10 = vector.shape_cast %9 : vector<2xf32> to vector<2x1xf32>
    %11 = arith.mulf %3, %4 : vector<2x32xf32>
    %cst_5 = arith.constant dense<0.000000e+00> : vector<2xf32>
    %12 = vector.multi_reduction <add>, %11, %cst_5 [1] : vector<2x32xf32> to vector<2xf32>
    %13 = vector.shape_cast %12 : vector<2xf32> to vector<2x1xf32>
    %14 = math.rsqrt %7 : vector<2x1xf32>
    %15 = arith.mulf %13, %14 : vector<2x1xf32>
    %16 = math.rsqrt %10 : vector<2x1xf32>
    %17 = arith.mulf %15, %16 : vector<2x1xf32>
    %c0_6 = arith.constant 0 : index
    %c0_7 = arith.constant 0 : index
    %18 = vector.load %arg3[%c0_6, %c0_7] : memref<8x128xf32, #tpu.memory_space<vmem>>, vector<8x128xf32>
    %cst_8 = arith.constant dense<0.000000e+00> : vector<1xf32>
    %19 = vector.multi_reduction <add>, %17, %cst_8 [0] : vector<2x1xf32> to vector<1xf32>
    %20 = vector.shape_cast %19 : vector<1xf32> to vector<1x1xf32>
    %21 = vector.broadcast %20 : vector<1x1xf32> to vector<8x128xf32>
    %22 = arith.addf %18, %21 : vector<8x128xf32>
    %c0_9 = arith.constant 0 : index
    %c0_10 = arith.constant 0 : index
    %23 = vector.load %arg3[%c0_9, %c0_10] : memref<8x128xf32, #tpu.memory_space<vmem>>, vector<8x128xf32>
    tpu.vector_store %arg3[%c0_9, %c0_10], %22 {strides = array<i32>} : memref<8x128xf32, #tpu.memory_space<vmem>>, vector<8x128xf32>,
    return
  }
  func.func @transform_0(%arg0: i32) -> (i32, i32) {
    %c0_i32 = arith.constant 0 : i32
    %c0_i32_0 = arith.constant 0 : i32
    return %arg0, %c0_i32 : i32, i32
  }
  func.func @transform_1(%arg0: i32) -> (i32, i32) {
    %c0_i32 = arith.constant 0 : i32
    %c0_i32_0 = arith.constant 0 : i32
    return %arg0, %c0_i32 : i32, i32
  }
  func.func @transform_2(%arg0: i32) -> (i32, i32) {
    %c0_i32 = arith.constant 0 : i32
    %c0_i32_0 = arith.constant 0 : i32
    %c0_i32_1 = arith.constant 0 : i32
    return %c0_i32, %c0_i32_0 : i32, i32
  }
}

</mosaic_0001>

<llo_original>
// kernel: tpu_custom_call.1
$region0: #{tpu_custom_call.1}
  #allocation0 [shape = 'u32[]', space=smem, size = 0x4, offset = 0x4, fixed_abs, tag = 'smem constant byte address 0x4 - core index']
  #allocation1 [shape = 'u32[144,128]{1,0:T(1,128)}', space=vmem, size = 0x12000, scoped, tag = 'internal scratch']
  %s0 = inlined_call_operand.hbm [shape: f32[2,32], index: 0, kind: input, shape index: {}]
  %s1 = inlined_call_operand.vmem [shape: f32[2,32], index: 1, kind: input, shape index: {}]
  %s2 = inlined_call_operand.hbm [shape: f32[8,128], index: 2, kind: output, shape index: {}]
  %s3 = sld [smem:[#allocation0]]
  $region26: #{tpu_custom_call.1} parent=0
    _
  %s5 = ssub.s32 1, %s3
  %s6 = scalar_select 0, %s5, %s3
  $region1: #{tpu_custom_call.1} parent=0
    #allocation2 [shape = 'u8[1024]{0}', space=vmem, size = 0x400, scoped, tag = 'input window, operand 0, single buffered']
    #allocation3 [shape = 's32[1]{0}', space=sflag, size = 0x4, scoped, tag = 'scoped memory for tpu_custom_call.1']
    #allocation4 [shape = 's32[1]{0}', space=sflag, size = 0x4, scoped, tag = 'scoped memory for tpu_custom_call.1']
    #allocation5 [shape = 'u8[4096]{0}', space=vmem, size = 0x1000, scoped, tag = 'output window, operand 0, single buffered']
    %7 = vsyncpa [#allocation3], 0
    %8 = vsyncpa [#allocation4], 0
    // Predicated region
    $region2: #{tpu_custom_call.1} parent=1 // pred_check
      _
    $region3: #{tpu_custom_call.1} parent=1 // pred_check_branch
      %10 = sbr.rel (0) target = $region5
    $region4: #{tpu_custom_call.1} parent=1 // pred_region
      %s12 = ssub.s32 32, 32
      %13 = vsyncadd [#allocation3], %s12
      %s15 = sshll.u32 [#allocation2], 4
      %s16 = int_to_ptr.vmem [resolvable:$true] %s15
      %18 = dma.hbm_to_vmem [thread:$0]  %s0, 32, %s16, [#allocation3]
    $region5: #{tpu_custom_call.1} parent=1 // pred_fallthru
      _
    // Predicated region
    $region6: #{tpu_custom_call.1} parent=1 // pred_check
      _
    $region7: #{tpu_custom_call.1} parent=1 // pred_check_branch
      %20 = sbr.rel (0) target = $region9
    $region8: #{tpu_custom_call.1} parent=1 // pred_region
      _
    $region9: #{tpu_custom_call.1} parent=1 // pred_fallthru
      _
    // Predicated region
    $region10: #{tpu_custom_call.1} parent=1 // pred_check
      _
    $region11: #{tpu_custom_call.1} parent=1 // pred_check_branch
      %22 = sbr.rel (0) target = $region13
    $region12: #{tpu_custom_call.1} parent=1 // pred_region
      %23 = dma.done [#allocation3], 32
    $region13: #{tpu_custom_call.1} parent=1 // pred_fallthru
      _
    %p24 = scmp.eq.s32.totalorder 0, 0
    // Predicated region
    $region14: #{tpu_custom_call.1} parent=1 // pred_check
      %p25 = pneg %p24
    $region15: #{tpu_custom_call.1} parent=1 // pred_check_branch
      %27 = sbr.rel (%p25) target = $region17
    $region16: #{tpu_custom_call.1} parent=1 // pred_region
      %28 = vst [vmem:[#allocation5] sm:$0xff] 0.0
    $region17: #{tpu_custom_call.1} parent=1 // pred_fallthru
      _
    %v29 = vld [vmem:[#allocation2] sm:$0x3]
    %v30 = vld [vmem:[%s1] sm:$0x3]
    %v31 = vmul.f32 %v29, %v29
    %vm32 = vcmask 254976
    %v33 = vsel %vm32, %v31, 0.0
    %34 = vadd.xlane.f32.xlu0 %v33
    %v35 = vpop.xlane.xlu0 %34
    %v36 = vmul.f32 %v30, %v30
    %v37 = vsel %vm32, %v36, 0.0
    %38 = vadd.xlane.f32.xlu0 %v37
    %v39 = vpop.xlane.xlu0 %38
    %v40 = vmul.f32 %v29, %v30
    %v41 = vsel %vm32, %v40, 0.0
    %42 = vadd.xlane.f32.xlu0 %v41
    %v43 = vpop.xlane.xlu0 %42
    %v44 = vrsqrt.pop %v35
    %v45 = vmul.f32 %v43, %v44
    %v46 = vrsqrt.pop %v39
    %v47 = vmul.f32 %v45, %v46
    %v48 = vld [vmem:[#allocation5] sm:$0xff]
    %vm49 = vcmask 1041408
    %v50 = vsel %vm49, %v47, 0.0
    %v51 = vrot.slane %v50, 4
    %v52 = vadd.f32 %v50, %v51
    %v53 = vrot.slane %v52, 2
    %v54 = vadd.f32 %v52, %v53
    %v55 = vrot.slane %v54, 1
    %v56 = vadd.f32 %v54, %v55
    %v57 = vadd.f32 %v48, %v56
    %58 = vst [vmem:[#allocation5] sm:$0xff] %v57
    // Predicated region
    $region18: #{tpu_custom_call.1} parent=1 // pred_check
      _
    $region19: #{tpu_custom_call.1} parent=1 // pred_check_branch
      %60 = sbr.rel (0) target = $region21
    $region20: #{tpu_custom_call.1} parent=1 // pred_region
      %s62 = ssub.s32 128, 128
      %63 = vsyncadd [#allocation4], %s62
      %s65 = sshll.u32 [#allocation5], 4
      %s66 = int_to_ptr.vmem [resolvable:$true] %s65
      %68 = dma.vmem_to_hbm [thread:$0]  %s66, 128, %s2, [#allocation4]
    $region21: #{tpu_custom_call.1} parent=1 // pred_fallthru
      _
    // Predicated region
    $region22: #{tpu_custom_call.1} parent=1 // pred_check
      _
    $region23: #{tpu_custom_call.1} parent=1 // pred_check_branch
      %70 = sbr.rel (0) target = $region25
    $region24: #{tpu_custom_call.1} parent=1 // pred_region
      %71 = dma.done [#allocation4], 128
    $region25: #{tpu_custom_call.1} parent=1 // pred_fallthru
      _
    %72 = vsyncpa [#allocation3], 1
    %73 = vsyncpa [#allocation4], 1

</llo_original>
